<compile_context>
chip_gen: v7x
topology: tpu7x:2x2x1
jax: 0.10.0
libtpu: 0.0.40
codegen_flags: <defaults>
</compile_context>

<pallas_src>
import jax
import jax.numpy as jnp
from jax.experimental import pallas as pl
from jax.experimental.pallas import tpu as pltpu


# ---------------------------------------------------------------------------
# Kernels
# ---------------------------------------------------------------------------

def lstm_step_kernel(xg_ref, wg_ref, bg_ref, hout_ref, hc_ref):
    """One-shot single-step LSTM (PyTorch gate order i,f,g,o with f dropped; c0 == 0).

    xg_ref  : (Bp, E+2H) bf16  [emb | ctx | h0]
    wg_ref  : (E+2H, 3H) bf16  fused gate weights (i, g, o)
    bg_ref  : (1, 3H)    f32   fused gate bias
    hout_ref: (Bp, H)    f32   new hidden state
    hc_ref  : (Bp, 2H)   bf16  fc_out LHS = [h1 | ctx]
    """
    H = hout_ref.shape[-1]
    E = xg_ref.shape[-1] - 2 * H

    xg = xg_ref[...]                                              # (Bp, E+2H) bf16
    gates = (jnp.dot(xg, wg_ref[...], preferred_element_type=jnp.float32)
             + bg_ref[...])                                       # (Bp, 3H) f32
    i_g = jax.nn.sigmoid(gates[:, 0 * H:1 * H])
    g_g = jnp.tanh(gates[:, 1 * H:2 * H])
    o_g = jax.nn.sigmoid(gates[:, 2 * H:3 * H])
    c1 = i_g * g_g                                                # f * c0 == 0
    h1 = o_g * jnp.tanh(c1)                                       # (Bp, H) f32

    hout_ref[...] = h1
    hc_ref[...] = jnp.concatenate(
        [h1.astype(jnp.bfloat16), xg[:, E:E + H]], axis=1)        # [h1 | ctx] bf16


def vocab_proj_kernel(hc_ref, wfc_ref, bfc_ref, pred_ref):
    """Weight-streaming vocab projection. Grid axis 0 = vocab tiles ("parallel").

    hc_ref  : (Bp, 2H)        bf16 resident [h1 | ctx]
    wfc_ref : (1, 2H, TILE_V) bf16 streamed, contiguous pre-tiled fc weight tile
    bfc_ref : (1, Vp)         f32  resident fc bias (sliced per tile in-kernel)
    pred_ref: (Bp, TILE_V)    f32  prediction tile
    """
    tile_v = pred_ref.shape[-1]
    off = pl.multiple_of(pl.program_id(0) * tile_v, 128)
    pred_ref[...] = (jnp.dot(hc_ref[...], wfc_ref[0],
                             preferred_element_type=jnp.float32)
                     + bfc_ref[:, pl.ds(off, tile_v)])


# ---------------------------------------------------------------------------
# Sizing helpers
# ---------------------------------------------------------------------------

def _vmem_plan():
    """Per-generation (fc-weight-tile byte budget, vmem_limit_bytes or None)."""
    try:
        kind = jax.devices()[0].device_kind.lower()
    except Exception:
        kind = ""
    if "v7" in kind:
        return 8 << 20, 48 << 20      # 64 MiB physical VMEM per TensorCore
    if "v6" in kind:
        return 16 << 20, 96 << 20     # 128 MiB physical
    if "v5" in kind:
        return 8 << 20, 64 << 20      # 128 MiB physical, 16 MiB default scoped limit
    return 8 << 20, None              # unknown chip: conservative tile, default limit


def _pick_tile_v(V, H, budget_bytes, weight_bytes=2):
    """Largest vocab tile (multiple of 128) whose (2H, tile_v) bf16 weight tile fits the
    per-tile budget. V need not divide it: vocab is zero-padded up to tile_v."""
    cap = max(128, budget_bytes // max(1, 2 * H * weight_bytes))
    v128 = ((V + 127) // 128) * 128
    for t in (8192, 4096, 2048, 1024, 512, 256, 128):
        if t <= cap and t <= v128:
            return t
    return 128


# ---------------------------------------------------------------------------
# One-time parameter prep + forward
# ---------------------------------------------------------------------------

def preprocess_params(params, *, tile_v=None, dtype=jnp.bfloat16):
    """One-time weight prep (split / drop forget gate / transpose / cast / pad /
    pre-tile). Done once per model, NOT per decode step."""
    V, E = params["embedding"].shape
    H = params["w_hh"].shape[1]
    if tile_v is None:
        tile_v = _pick_tile_v(V, H, _vmem_plan()[0])

    w_ih, w_hh = params["w_ih"], params["w_hh"]          # (4H, E+H), (4H, H)
    b = params["b_ih"] + params["b_hh"]                  # (4H,)

    def keep_igo(w):  # drop forget-gate rows (c0 == 0 makes them dead work)
        return jnp.concatenate([w[0:H], w[2 * H:3 * H], w[3 * H:4 * H]], axis=0)

    # fused gate weight for x = [emb | ctx | h0]  ->  (E+2H, 3H)
    w_g = jnp.concatenate([keep_igo(w_ih), keep_igo(w_hh)], axis=1).T.astype(dtype)
    b_g = jnp.concatenate([b[0:H], b[2 * H:3 * H], b[3 * H:4 * H]])[None, :]

    # fc_out: transpose, zero-pad vocab to a multiple of tile_v, pre-tile so each
    # (2H, tile_v) tile is one contiguous HBM slab.
    n_t = pl.cdiv(V, tile_v)
    Vp = n_t * tile_v
    w_fc = params["fc_w"].T.astype(dtype)                               # (2H, V)
    w_fc = jnp.zeros((2 * H, Vp), dtype).at[:, :V].set(w_fc)
    w_fc_t = w_fc.reshape(2 * H, n_t, tile_v).transpose(1, 0, 2)        # (Nt, 2H, tile_v)
    b_fc = jnp.zeros((1, Vp), jnp.float32).at[0, :V].set(params["fc_b"])

    return {
        "embedding": params["embedding"],                # (V, E)            f32
        "w_g": w_g,                                      # (E+2H, 3H)        bf16
        "b_g": b_g.astype(jnp.float32),                  # (1, 3H)           f32
        "w_fc_t": w_fc_t,                                # (Nt, 2H, tile_v)  bf16
        "b_fc": b_fc,                                    # (1, Vp)           f32
    }


def decoder_forward(tokens, hidden, encoder_outputs, attn_weights, prep):
    """tokens: (B,) int32; hidden: (B,H); encoder_outputs: (B,S,H); attn_weights: (B,1,S)."""
    B, S, H = encoder_outputs.shape
    V, E = prep["embedding"].shape
    n_t, _, tile_v = prep["w_fc_t"].shape
    Vp = prep["b_fc"].shape[1]
    Bp = ((B + 7) // 8) * 8                               # pad batch to sublane multiple
    _, vmem_limit = _vmem_plan()

    # One-time wrapper glue (embedding gather + attention-context bmm); doing ctx here
    # removes the (B,S,H) encoder_outputs DMA from the kernels entirely.
    emb = prep["embedding"][tokens]                                       # (B, E)
    ctx = jnp.einsum("bs,bsh->bh", attn_weights[:, 0, :], encoder_outputs,
                     preferred_element_type=jnp.float32)                  # (B, H)
    xg = jnp.concatenate([emb, ctx, hidden], axis=1)                      # (B, E+2H)
    xg = jnp.zeros((Bp, E + 2 * H), jnp.float32).at[:B].set(xg).astype(jnp.bfloat16)

    # (1) tiny one-shot LSTM-step kernel -> h1 (f32) and the bf16 fc LHS [h1 | ctx]
    hout, hc = pl.pallas_call(
        lstm_step_kernel,
        out_shape=(jax.ShapeDtypeStruct((Bp, H), jnp.float32),
                   jax.ShapeDtypeStruct((Bp, 2 * H), jnp.bfloat16)),
    )(xg, prep["w_g"], prep["b_g"])

    # (2) weight-streaming vocab projection; vocab axis is "parallel" (shards across the
    # two TensorCores on v7x), fc weight tiles streamed as contiguous HBM slabs.
    pred = pl.pallas_call(
        vocab_proj_kernel,
        out_shape=jax.ShapeDtypeStruct((Bp, Vp), jnp.float32),
        grid_spec=pltpu.PrefetchScalarGridSpec(
            num_scalar_prefetch=0,
            grid=(n_t,),
            in_specs=[
                pl.BlockSpec((Bp, 2 * H), lambda j: (0, 0)),             # resident LHS
                pl.BlockSpec((1, 2 * H, tile_v), lambda j: (j, 0, 0)),   # streamed fc W
                pl.BlockSpec((1, Vp), lambda j: (0, 0)),                 # resident fc b
            ],
            out_specs=pl.BlockSpec((Bp, tile_v), lambda j: (0, j)),      # pred tile
        ),
        compiler_params=pltpu.CompilerParams(
            dimension_semantics=("parallel",),
            vmem_limit_bytes=vmem_limit),
    )(hc, prep["w_fc_t"], prep["b_fc"])

    return pred[:B, :V], hout[:B]


decoder_forward_jit = jax.jit(decoder_forward)


# ---------------------------------------------------------------------------
# Parameters + pure-JAX reference
# ---------------------------------------------------------------------------

def init_params(key, vocab_size, embed_size, hidden_size):
    ks = jax.random.split(key, 7)
    sc = 0.1
    return {
        "embedding": sc * jax.random.normal(ks[0], (vocab_size, embed_size), jnp.float32),
        "w_ih": sc * jax.random.normal(ks[1], (4 * hidden_size, embed_size + hidden_size), jnp.float32),
        "w_hh": sc * jax.random.normal(ks[2], (4 * hidden_size, hidden_size), jnp.float32),
        "b_ih": sc * jax.random.normal(ks[3], (4 * hidden_size,), jnp.float32),
        "b_hh": sc * jax.random.normal(ks[4], (4 * hidden_size,), jnp.float32),
        "fc_w": sc * jax.random.normal(ks[5], (vocab_size, 2 * hidden_size), jnp.float32),
        "fc_b": sc * jax.random.normal(ks[6], (vocab_size,), jnp.float32),
    }


def reference_forward(tokens, hidden, encoder_outputs, attn_weights, params):
    """Pure-JAX f32 reference mirroring the PyTorch forward."""
    H = hidden.shape[1]
    emb = params["embedding"][tokens]                                   # (B, E)
    ctx = jnp.einsum("bs,bsh->bh", attn_weights[:, 0, :], encoder_outputs)
    x = jnp.concatenate([emb, ctx], axis=1)                             # (B, E+H)
    gates = x @ params["w_ih"].T + params["b_ih"] + hidden @ params["w_hh"].T + params["b_hh"]
    i = jax.nn.sigmoid(gates[:, 0 * H:1 * H])
    f = jax.nn.sigmoid(gates[:, 1 * H:2 * H])
    g = jnp.tanh(gates[:, 2 * H:3 * H])
    o = jax.nn.sigmoid(gates[:, 3 * H:4 * H])
    c1 = f * jnp.zeros_like(hidden) + i * g
    h1 = o * jnp.tanh(c1)
    pred = jnp.concatenate([h1, ctx], axis=1) @ params["fc_w"].T + params["fc_b"]
    return pred, h1


if __name__ == "__main__":
    # V deliberately NOT a multiple of 128 to exercise the vocab-padding path;
    # tile_v=128 -> grid of 4 streamed fc tiles.
    B, S, E, H, V = 2, 8, 32, 32, 500

    key = jax.random.PRNGKey(0)
    kp, kt, kh, ke, ka = jax.random.split(key, 5)

    params = init_params(kp, V, E, H)
    prep = preprocess_params(params, tile_v=128)                          # one-time prep

    tokens = jax.random.randint(kt, (B,), 0, V, dtype=jnp.int32)          # (B,)
    hidden = jax.random.normal(kh, (B, H), jnp.float32)                    # (B, H)
    encoder_outputs = jax.random.normal(ke, (B, S, H), jnp.float32)        # (B, S, H)
    attn_logits = jax.random.normal(ka, (B, 1, S), jnp.float32)
    attn_weights = jax.nn.softmax(attn_logits, axis=-1)                    # (B, 1, S)

    pred, hidden_out = decoder_forward_jit(tokens, hidden, encoder_outputs,
                                           attn_weights, prep)
    jax.block_until_ready((pred, hidden_out))

    pred_ref, hidden_ref = reference_forward(tokens, hidden, encoder_outputs,
                                             attn_weights, params)
    assert pred.shape == (B, V) and hidden_out.shape == (B, H)
    # bf16 weights/activations on the kernel path vs f32 reference -> relaxed tolerances
    assert jnp.allclose(pred, pred_ref, atol=2e-2, rtol=2e-2), \
        float(jnp.max(jnp.abs(pred - pred_ref)))
    assert jnp.allclose(hidden_out, hidden_ref, atol=2e-2, rtol=2e-2), \
        float(jnp.max(jnp.abs(hidden_out - hidden_ref)))

    print("KERNEL_OK")
</pallas_src>

<mosaic_0001>
module attributes {stable_mosaic.version = 11 : i64} {
  func.func @lstm_step_kernel(%arg0: memref<8x96xbf16, #tpu.memory_space<vmem>>, %arg1: memref<96x96xbf16, #tpu.memory_space<vmem>>, %arg2: memref<1x96xf32, #tpu.memory_space<vmem>>, %arg3: memref<8x32xf32, #tpu.memory_space<vmem>>, %arg4: memref<8x64xbf16, #tpu.memory_space<vmem>>) attributes {dimension_semantics = [], scalar_prefetch = 0 : i64, scratch_operands = 0 : i64, tpu.core_type = #tpu.core_type<tc>} {
    %c0 = arith.constant 0 : index
    %c0_0 = arith.constant 0 : index
    %0 = vector.load %arg0[%c0, %c0_0] : memref<8x96xbf16, #tpu.memory_space<vmem>>, vector<8x96xbf16>
    %c0_1 = arith.constant 0 : index
    %c0_2 = arith.constant 0 : index
    %1 = vector.load %arg1[%c0_1, %c0_2] : memref<96x96xbf16, #tpu.memory_space<vmem>>, vector<96x96xbf16>
    %cst = arith.constant dense<0.000000e+00> : vector<8x96xf32>
    %2 = tpu.matmul %0, %1, %cst {dimension_numbers = #tpu.dot_dimension_numbers<[1], [0], [0], [1], [0, 0, 1, 1], [], []>} : vector<8x96xbf16>, vector<96x96xbf16>, vector<8x96xf32> -> vector<8x96xf32>
    %c0_3 = arith.constant 0 : index
    %c0_4 = arith.constant 0 : index
    %3 = vector.load %arg2[%c0_3, %c0_4] : memref<1x96xf32, #tpu.memory_space<vmem>>, vector<1x96xf32>
    %4 = vector.broadcast %3 : vector<1x96xf32> to vector<8x96xf32>
    %5 = arith.addf %2, %4 : vector<8x96xf32>
    %6 = vector.extract_strided_slice %5 {offsets = [0, 0], sizes = [8, 32], strides = [1, 1]} : vector<8x96xf32> to vector<8x32xf32>
    %7 = arith.negf %6 : vector<8x32xf32>
    %8 = math.exp %7 : vector<8x32xf32>
    %cst_5 = arith.constant 1.000000e+00 : f32
    %9 = vector.broadcast %cst_5 : f32 to vector<8x32xf32>
    %10 = arith.addf %9, %8 : vector<8x32xf32>
    %11 = arith.divf %9, %10 : vector<8x32xf32>
    %12 = vector.extract_strided_slice %5 {offsets = [0, 32], sizes = [8, 32], strides = [1, 1]} : vector<8x96xf32> to vector<8x32xf32>
    %13 = math.tanh %12 : vector<8x32xf32>
    %14 = vector.extract_strided_slice %5 {offsets = [0, 64], sizes = [8, 32], strides = [1, 1]} : vector<8x96xf32> to vector<8x32xf32>
    %15 = arith.negf %14 : vector<8x32xf32>
    %16 = math.exp %15 : vector<8x32xf32>
    %cst_6 = arith.constant 1.000000e+00 : f32
    %17 = vector.broadcast %cst_6 : f32 to vector<8x32xf32>
    %18 = arith.addf %17, %16 : vector<8x32xf32>
    %19 = arith.divf %17, %18 : vector<8x32xf32>
    %20 = arith.mulf %11, %13 : vector<8x32xf32>
    %21 = math.tanh %20 : vector<8x32xf32>
    %22 = arith.mulf %19, %21 : vector<8x32xf32>
    %c0_7 = arith.constant 0 : index
    %c0_8 = arith.constant 0 : index
    %23 = vector.load %arg3[%c0_7, %c0_8] : memref<8x32xf32, #tpu.memory_space<vmem>>, vector<8x32xf32>
    tpu.vector_store %arg3[%c0_7, %c0_8], %22 {strides = array<i32>} : memref<8x32xf32, #tpu.memory_space<vmem>>, vector<8x32xf32>,
    %24 = arith.truncf %22 : vector<8x32xf32> to vector<8x32xbf16>
    %25 = vector.extract_strided_slice %0 {offsets = [0, 32], sizes = [8, 32], strides = [1, 1]} : vector<8x96xbf16> to vector<8x32xbf16>
    %26 = tpu.concatenate %24, %25 in 1 : vector<8x32xbf16>, vector<8x32xbf16> -> vector<8x64xbf16>
    %c0_9 = arith.constant 0 : index
    %c0_10 = arith.constant 0 : index
    %27 = vector.load %arg4[%c0_9, %c0_10] : memref<8x64xbf16, #tpu.memory_space<vmem>>, vector<8x64xbf16>
    tpu.vector_store %arg4[%c0_9, %c0_10], %26 {strides = array<i32>} : memref<8x64xbf16, #tpu.memory_space<vmem>>, vector<8x64xbf16>,
    return
  }
}

module attributes {stable_mosaic.version = 11 : i64} {
  func.func @vocab_proj_kernel(%arg0: i32, %arg1: memref<8x64xbf16, #tpu.memory_space<vmem>>, %arg2: memref<1x64x128xbf16, #tpu.memory_space<vmem>>, %arg3: memref<1x512xf32, #tpu.memory_space<vmem>>, %arg4: memref<8x128xf32, #tpu.memory_space<vmem>>) attributes {dimension_semantics = [#tpu.dimension_semantics<parallel>], iteration_bounds = array<i64: 4>, scalar_prefetch = 0 : i64, scratch_operands = 0 : i64, tpu.core_type = #tpu.core_type<tc>, window_params = [{pipeline_mode = #tpu.pipeline_mode<synchronous>, transform_indices = @transform_0, window_bounds = array<i64: 8, 64>}, {transform_indices = @transform_1, window_bounds = array<i64: 1, 64, 128>}, {pipeline_mode = #tpu.pipeline_mode<synchronous>, transform_indices = @transform_2, window_bounds = array<i64: 1, 512>}, {transform_indices = @transform_3, window_bounds = array<i64: 8, 128>}]} {
    %c128_i32 = arith.constant 128 : i32
    %0 = arith.muli %arg0, %c128_i32 : i32
    %1 = tpu.assume_multiple %0, 128 : i32
    %c0 = arith.constant 0 : index
    %c0_0 = arith.constant 0 : index
    %2 = vector.load %arg1[%c0, %c0_0] : memref<8x64xbf16, #tpu.memory_space<vmem>>, vector<8x64xbf16>
    %c0_1 = arith.constant 0 : index
    %c0_2 = arith.constant 0 : index
    %c0_3 = arith.constant 0 : index
    %3 = vector.load %arg2[%c0_1, %c0_2, %c0_3] : memref<1x64x128xbf16, #tpu.memory_space<vmem>>, vector<1x64x128xbf16>
    %4 = vector.shape_cast %3 : vector<1x64x128xbf16> to vector<64x128xbf16>
    %cst = arith.constant dense<0.000000e+00> : vector<8x128xf32>
    %5 = tpu.matmul %2, %4, %cst {dimension_numbers = #tpu.dot_dimension_numbers<[1], [0], [0], [1], [0, 0, 1, 1], [], []>} : vector<8x64xbf16>, vector<64x128xbf16>, vector<8x128xf32> -> vector<8x128xf32>
    %c0_4 = arith.constant 0 : index
    %6 = arith.index_cast %1 : i32 to index
    %7 = vector.load %arg3[%c0_4, %6] : memref<1x512xf32, #tpu.memory_space<vmem>>, vector<1x128xf32>
    %8 = vector.broadcast %7 : vector<1x128xf32> to vector<8x128xf32>
    %9 = arith.addf %5, %8 : vector<8x128xf32>
    %c0_5 = arith.constant 0 : index
    %c0_6 = arith.constant 0 : index
    %10 = vector.load %arg4[%c0_5, %c0_6] : memref<8x128xf32, #tpu.memory_space<vmem>>, vector<8x128xf32>
    tpu.vector_store %arg4[%c0_5, %c0_6], %9 {strides = array<i32>} : memref<8x128xf32, #tpu.memory_space<vmem>>, vector<8x128xf32>,
    return
  }
  func.func @transform_0(%arg0: i32) -> (i32, i32) {
    %c0_i32 = arith.constant 0 : i32
    %c0_i32_0 = arith.constant 0 : i32
    %c0_i32_1 = arith.constant 0 : i32
    return %c0_i32, %c0_i32_0 : i32, i32
  }
  func.func @transform_1(%arg0: i32) -> (i32, i32, i32) {
    %c0_i32 = arith.constant 0 : i32
    %c0_i32_0 = arith.constant 0 : i32
    %c0_i32_1 = arith.constant 0 : i32
    return %arg0, %c0_i32, %c0_i32_0 : i32, i32, i32
  }
  func.func @transform_2(%arg0: i32) -> (i32, i32) {
    %c0_i32 = arith.constant 0 : i32
    %c0_i32_0 = arith.constant 0 : i32
    %c0_i32_1 = arith.constant 0 : i32
    return %c0_i32, %c0_i32_0 : i32, i32
  }
  func.func @transform_3(%arg0: i32) -> (i32, i32) {
    %c0_i32 = arith.constant 0 : i32
    %c0_i32_0 = arith.constant 0 : i32
    return %c0_i32, %arg0 : i32, i32
  }
}

</mosaic_0001>

<llo_original>
// kernel: decoder_forward.2
$region0: #{decoder_forward.2}
  #allocation0 [shape = 'u32[]', space=smem, size = 0x4, offset = 0x4, fixed_abs, tag = 'smem constant byte address 0x4 - core index']
  #allocation1 [shape = 'u32[144,128]{1,0:T(1,128)}', space=vmem, size = 0x12000, scoped, tag = 'internal scratch']
  %s0 = inlined_call_operand.vmem [shape: bf16[8,96], index: 0, kind: input, shape index: {}]
  %s1 = inlined_call_operand.vmem [shape: bf16[96,96], index: 1, kind: input, shape index: {}]
  %s2 = inlined_call_operand.vmem [shape: f32[1,96], index: 2, kind: input, shape index: {}]
  %s3 = inlined_call_operand.vmem [shape: f32[8,32], index: 3, kind: output, shape index: {0}]
  %s4 = inlined_call_operand.vmem [shape: bf16[8,64], index: 4, kind: output, shape index: {1}]
  %5 = xla_tuple %s3, %s4
  %s6 = sld [smem:[#allocation0]]
  $region30: #{decoder_forward.2} parent=0
    _
  %s8 = ssub.s32 1, %s6
  %s9 = scalar_select 0, %s8, %s6
  // Predicated region
  $region2: #{decoder_forward.2} parent=0 // pred_check
    _
  $region3: #{decoder_forward.2} parent=0 // pred_check_branch
    %11 = sbr.rel (0) target = $region5
  $region4: #{decoder_forward.2} parent=0 // pred_region
    _
  $region5: #{decoder_forward.2} parent=0 // pred_fallthru
    _
  // Predicated region
  $region6: #{decoder_forward.2} parent=0 // pred_check
    _
  $region7: #{decoder_forward.2} parent=0 // pred_check_branch
    %13 = sbr.rel (0) target = $region9
  $region8: #{decoder_forward.2} parent=0 // pred_region
    _
  $region9: #{decoder_forward.2} parent=0 // pred_fallthru
    _
  // Predicated region
  $region10: #{decoder_forward.2} parent=0 // pred_check
    _
  $region11: #{decoder_forward.2} parent=0 // pred_check_branch
    %15 = sbr.rel (0) target = $region13
  $region12: #{decoder_forward.2} parent=0 // pred_region
    _
  $region13: #{decoder_forward.2} parent=0 // pred_fallthru
    _
  %v17 = vld [vmem:[%s0] sm:$0xf]
  %v18 = vld [vmem:[%s1] sm:$0xf]
  %v19 = vld [vmem:[%s1 + $0x4] sm:$0xf]
  %v20 = vld [vmem:[%s1 + $0x8] sm:$0xf]
  %v21 = vld [vmem:[%s1 + $0xc] sm:$0xf]
  %v22 = vld [vmem:[%s1 + $0x10] sm:$0xf]
  %v23 = vld [vmem:[%s1 + $0x14] sm:$0xf]
  %v24 = vld [vmem:[%s1 + $0x18] sm:$0xf]
  %v25 = vld [vmem:[%s1 + $0x1c] sm:$0xf]
  %v26 = vld [vmem:[%s1 + $0x20] sm:$0xf]
  %v27 = vld [vmem:[%s1 + $0x24] sm:$0xf]
  %v28 = vld [vmem:[%s1 + $0x28] sm:$0xf]
  %v29 = vld [vmem:[%s1 + $0x2c] sm:$0xf]
  %v30 = vld [vmem:[%s2] sm:$0x1]
  %v32 = vlaneseq
  %v33 = vshrl.u32 %v32, 7
  %v34 = vsub.s32 0, %v33
  %v35 = vrot.slane %v30, %v34
  %v49 = vunpack.c.l.b16 %v18
  %v50 = vunpack.c.l.b16 %v19
  %v51 = vunpack.c.l.b16 %v20
  %v52 = vunpack.c.l.b16 %v21
  %v53 = vunpack.c.l.b16 %v22
  %v54 = vunpack.c.l.b16 %v23
  %v55 = vunpack.c.l.b16 %v24
  %v56 = vunpack.c.l.b16 %v25
  %v57 = vunpack.c.l.b16 %v26
  %v58 = vunpack.c.l.b16 %v27
  %v59 = vunpack.c.l.b16 %v28
  %v60 = vunpack.c.l.b16 %v29
  %v61 = vpack.c.b16 %v50, %v49
  %v62 = vpack.c.b16 %v52, %v51
  %v63 = vpack.c.b16 %v54, %v53
  %v64 = vpack.c.b16 %v56, %v55
  %v65 = vpack.c.b16 %v58, %v57
  %v66 = vpack.c.b16 %v60, %v59
  %vm73 = vcmask 785408
  %v75 = vsel %vm73, %v17, 0
  %77 = vmatprep.subr.bf16.mxu0 0
  %78 = vmatpush1.bf16.msra.mxu0 %v61
  %79 = vmatprep.subr.bf16.mxu0 0
  %80 = vmatpush1.bf16.msra.mxu0 %v62
  %81 = vmatprep.subr.bf16.mxu0 0
  %82 = vmatpush1.bf16.msra.mxu0 %v63
  %83 = vmatprep.subr.bf16.mxu0 0
  %84 = vmatpush1.bf16.msra.mxu0 %v64
  %85 = vmatprep.subr.bf16.mxu0 0
  %86 = vmatpush1.bf16.msra.mxu0 %v65
  %87 = vmatprep.subr.bf16.mxu0 0
  %88 = vmatpush1.bf16.msra.mxu0 %v66
  %89 = vmatprep.subr.bf16.mxu0 0
  %90 = vmatpush1.bf16.msra.mxu0 0
  %91 = vmatprep.subr.bf16.mxu0 0
  %92 = vmatpush1.bf16.msra.mxu0 0
  %93 = vmatprep.subr.bf16.mxu0 0
  %94 = vmatpush1.bf16.msra.mxu0 0
  %95 = vmatprep.subr.bf16.mxu0 0
  %96 = vmatpush1.bf16.msra.mxu0 0
  %97 = vmatprep.subr.bf16.mxu0 0
  %98 = vmatpush1.bf16.msra.mxu0 0
  %99 = vmatprep.subr.bf16.mxu0 0
  %100 = vmatpush1.bf16.msra.mxu0 0
  %101 = vmatprep.subr.bf16.mxu0 0
  %102 = vmatpush1.bf16.msra.mxu0 0
  %103 = vmatprep.subr.bf16.mxu0 0
  %104 = vmatpush1.bf16.msra.mxu0 0
  %105 = vmatprep.subr.bf16.mxu0 0
  %106 = vmatpush1.bf16.msra.mxu0 0
  %107 = vmatprep.subr.bf16.mxu0 0
  %108 = vmatpush1.bf16.msra.mxu0 0
  %109 = vmatprep.mubr.bf16.mxu0 0
  %110 = vmatmul.mubr.bf16.gmra.mrb[0].mxu0 %v75
  %v111 = vpop.f32.mrb[0].mxu0
  %v112 = vadd.f32 %v35, %v111
  %v113 = vpop.f32.mrb[0].mxu0
  %v114 = vpop.f32.mrb[0].mxu0
  %v115 = vpop.f32.mrb[0].mxu0
  %116 = vdwg.mxu0
  %v117 = vxor.u32 %v112, 2147483648
  %v118 = vmul.f32 %v117, 1.442695
  %v119 = vpow.pop %v118
  %v120 = vadd.f32 %v119, 1.0
  %v121 = vrcp.pop %v120
  %v122 = vmul.f32 1.0, %v121
  %v123 = vtanh.pop %v112
  %125 = vrot.lane.b32.xlu0 %v123, 96
  %v126 = vpop.permute.xlu0 %125
  %v128 = vmul.f32 %v122, %v126
  %v129 = vtanh.pop %v128
  %131 = vrot.lane.b32.xlu0 %v129, 64
  %v132 = vpop.permute.xlu0 %131
  %v134 = vmul.f32 %v122, %v132
  %136 = vrot.lane.b32.xlu0 %v134, 64
  %v137 = vpop.permute.xlu0 %136
  %vm139 = vcmask 261120
  %140 = vst.msk [vmem:[%s3] sm:$0xff] %vm139, %v137
  %v141 = vpack.c.bf16 %v134, %v134
  %143 = vrot.lane.b32.xlu0 %v141, 64
  %v144 = vpop.permute.xlu0 %143
  %v146 = vsel %vm139, %v144, %v17
  %vm148 = vcmask 519168
  %149 = vst.msk [vmem:[%s4] sm:$0xf] %vm148, %v146
  // Predicated region
  $region14: #{decoder_forward.2} parent=0 // pred_check
    _
  $region15: #{decoder_forward.2} parent=0 // pred_check_branch
    %151 = sbr.rel (0) target = $region17
  $region16: #{decoder_forward.2} parent=0 // pred_region
    _
  $region17: #{decoder_forward.2} parent=0 // pred_fallthru
    _
  // Predicated region
  $region18: #{decoder_forward.2} parent=0 // pred_check
    _
  $region19: #{decoder_forward.2} parent=0 // pred_check_branch
    %153 = sbr.rel (0) target = $region21
  $region20: #{decoder_forward.2} parent=0 // pred_region
    _
  $region21: #{decoder_forward.2} parent=0 // pred_fallthru
    _
  // Predicated region
  $region22: #{decoder_forward.2} parent=0 // pred_check
    _
  $region23: #{decoder_forward.2} parent=0 // pred_check_branch
    %155 = sbr.rel (0) target = $region25
  $region24: #{decoder_forward.2} parent=0 // pred_region
    _
  $region25: #{decoder_forward.2} parent=0 // pred_fallthru
    _
  // Predicated region
  $region26: #{decoder_forward.2} parent=0 // pred_check
    _
  $region27: #{decoder_forward.2} parent=0 // pred_check_branch
    %157 = sbr.rel (0) target = $region29
  $region28: #{decoder_forward.2} parent=0 // pred_region
    _
  $region29: #{decoder_forward.2} parent=0 // pred_fallthru
    _

// kernel: decoder_forward.3
$region0: #{decoder_forward.3}
  #allocation0 [shape = 'u32[]', space=smem, size = 0x4, offset = 0x4, fixed_abs, tag = 'smem constant byte address 0x4 - core index']
  #allocation1 [shape = 'u32[144,128]{1,0:T(1,128)}', space=vmem, size = 0x12000, scoped, tag = 'internal scratch']
  %s0 = inlined_call_operand.vmem [shape: bf16[8,64], index: 0, kind: input, shape index: {}]
  %s1 = inlined_call_operand.vmem [shape: bf16[4,64,128], index: 1, kind: input, shape index: {}]
  %s2 = inlined_call_operand.vmem [shape: f32[1,512], index: 2, kind: input, shape index: {}]
  %s3 = inlined_call_operand.vmem [shape: f32[8,512], index: 3, kind: output, shape index: {}]
  %s4 = sld [smem:[#allocation0]]
  $region45: #{decoder_forward.3} parent=0
    _
  %s6 = ssub.s32 1, %s4
  %s7 = scalar_select 0, %s6, %s4
  loop: start=0, step=1, limit=6
  $region2: #{decoder_forward.3} parent=0 // loop_pre_header
    _
  $region3: #{decoder_forward.3} parent=0 // loop_header
    %s9 = sphi 0, %s13
    %p10 = scmp.ge.s32.totalorder %s9, 6
    %s17 = sphi 0, %s17
    %s19 = sphi 0, %s17
    %s20 = sphi 0, %s19
    %s34 = sphi 0, %s20
    %s40 = sphi 0, %s42
    %s43 = sphi 0, %s40
    %s44 = sphi 0, %s43
    %s60 = sphi 0, %s44
    %s64 = sphi 0, %s64
    %s66 = sphi 0, %s64
    %s67 = sphi 0, %s66
    %s81 = sphi 0, %s67
    %s87 = sphi 0, %s89
    %s90 = sphi 0, %s87
    %s91 = sphi 0, %s90
    %s107 = sphi 0, %s91
  $region4: #{decoder_forward.3} parent=0 // loop_header_branch
    %12 = sbr.rel (%p10) target = $region8
  $region5: #{decoder_forward.3} parent=0 // loop_body
    %s14 = ssub.s32 %s9, 1
    %s15 = ssub.s32 %s9, 2
    %s16 = sadd.s32 %s9, 1
    %s18 = sadd.s32 %s17, 1
    %p21 = scmp.eq.s32.totalorder %s9, 3
    %p22 = scmp.ne.s32.totalorder %s17, %s19
    %p23 = scmp.eq.s32.totalorder %s9, 0
    %p24 = por %p22, %p23
    %p25 = scmp.ne.s32.totalorder %s17, %s19
    %p26 = scmp.eq.s32.totalorder %s14, 3
    %p27 = por %p25, %p26
    %p28 = scmp.ne.s32.totalorder %s19, %s20
    %p29 = scmp.eq.s32.totalorder %s14, 0
    %p30 = por %p28, %p29
    %p31 = scmp.ne.s32.totalorder %s19, %s20
    %p32 = scmp.eq.s32.totalorder %s15, 3
    %p33 = por %p31, %p32
    %p35 = scmp.ne.s32.totalorder %s20, %s34
    %p36 = scmp.eq.s32.totalorder %s15, 0
    %p37 = por %p35, %p36
    %s38 = ssub.s32 %s9, %s16
    %p39 = scmp.eq.s32.totalorder %s38, 0
    %s41 = sadd.s32 %s40, 1
    %s42 = scalar_select %p39, %s40, %s41
    %p45 = pneg %p39
    %p46 = scmp.eq.s32.totalorder %s9, 3
    %p47 = por %p45, %p46
    %p48 = scmp.ne.s32.totalorder %s40, %s43
    %p49 = scmp.eq.s32.totalorder %s9, 0
    %p50 = por %p48, %p49
    %p51 = scmp.ne.s32.totalorder %s40, %s43
    %p52 = scmp.eq.s32.totalorder %s14, 3
    %p53 = por %p51, %p52
    %p54 = scmp.ne.s32.totalorder %s43, %s44
    %p55 = scmp.eq.s32.totalorder %s14, 0
    %p56 = por %p54, %p55
    %p57 = scmp.ne.s32.totalorder %s43, %s44
    %p58 = scmp.eq.s32.totalorder %s15, 3
    %p59 = por %p57, %p58
    %p61 = scmp.ne.s32.totalorder %s44, %s60
    %p62 = scmp.eq.s32.totalorder %s15, 0
    %p63 = por %p61, %p62
    %s65 = sadd.s32 %s64, 1
    %p68 = scmp.eq.s32.totalorder %s9, 3
    %p69 = scmp.ne.s32.totalorder %s64, %s66
    %p70 = scmp.eq.s32.totalorder %s9, 0
    %p71 = por %p69, %p70
    %p72 = scmp.ne.s32.totalorder %s64, %s66
    %p73 = scmp.eq.s32.totalorder %s14, 3
    %p74 = por %p72, %p73
    %p75 = scmp.ne.s32.totalorder %s66, %s67
    %p76 = scmp.eq.s32.totalorder %s14, 0
    %p77 = por %p75, %p76
    %p78 = scmp.ne.s32.totalorder %s66, %s67
    %p79 = scmp.eq.s32.totalorder %s15, 3
    %p80 = por %p78, %p79
    %p82 = scmp.ne.s32.totalorder %s67, %s81
    %p83 = scmp.eq.s32.totalorder %s15, 0
    %p84 = por %p82, %p83
    %s85 = ssub.s32 %s9, %s16
    %p86 = scmp.eq.s32.totalorder %s85, 0
    %s88 = sadd.s32 %s87, 1
    %s89 = scalar_select %p86, %s87, %s88
    %p92 = pneg %p86
    %p93 = scmp.eq.s32.totalorder %s9, 3
    %p94 = por %p92, %p93
    %p95 = scmp.ne.s32.totalorder %s87, %s90
    %p96 = scmp.eq.s32.totalorder %s9, 0
    %p97 = por %p95, %p96
    %p98 = scmp.ne.s32.totalorder %s87, %s90
    %p99 = scmp.eq.s32.totalorder %s14, 3
    %p100 = por %p98, %p99
    %p101 = scmp.ne.s32.totalorder %s90, %s91
    %p102 = scmp.eq.s32.totalorder %s14, 0
    %p103 = por %p101, %p102
    %p104 = scmp.ne.s32.totalorder %s90, %s91
    %p105 = scmp.eq.s32.totalorder %s15, 3
    %p106 = por %p104, %p105
    %p108 = scmp.ne.s32.totalorder %s91, %s107
    %p109 = scmp.eq.s32.totalorder %s15, 0
    %p110 = por %p108, %p109
    %p111 = scmp.le.s32.totalorder 1, %s9
    %p112 = scmp.lt.s32.totalorder %s9, 5
    %p113 = pnand %p111, %p112
    %p114 = pneg %p113
    // Predicated region
    $region9: #{decoder_forward.3} parent=5 // pred_check
      _
    $region10: #{decoder_forward.3} parent=5 // pred_check_branch
      %116 = sbr.rel (%p113) target = $region12
    $region11: #{decoder_forward.3} parent=5 // pred_region
      %s117 = ssub.s32 %s9, 1
      // Predicated region
      $region13: #{decoder_forward.3} parent=11 // pred_check
        %p118 = pneg %p30
      $region14: #{decoder_forward.3} parent=11 // pred_check_branch
        %120 = sbr.rel (%p118) target = $region16
      $region15: #{decoder_forward.3} parent=11 // pred_region
        _
      $region16: #{decoder_forward.3} parent=11 // pred_fallthru
        _
      // Predicated region
      $region17: #{decoder_forward.3} parent=11 // pred_check
        %p121 = pneg %p77
      $region18: #{decoder_forward.3} parent=11 // pred_check_branch
        %123 = sbr.rel (%p121) target = $region20
      $region19: #{decoder_forward.3} parent=11 // pred_region
        _
      $region20: #{decoder_forward.3} parent=11 // pred_fallthru
        _
    $region12: #{decoder_forward.3} parent=5 // pred_fallthru
      _
    %p124 = scmp.lt.s32.totalorder %s9, 4
    // Predicated region
    $region21: #{decoder_forward.3} parent=5 // pred_check
      %p125 = pneg %p124
    $region22: #{decoder_forward.3} parent=5 // pred_check_branch
      %127 = sbr.rel (%p125) target = $region24
    $region23: #{decoder_forward.3} parent=5 // pred_region
      // Predicated region
      $region25: #{decoder_forward.3} parent=23 // pred_check
        %p128 = pneg %p50
      $region26: #{decoder_forward.3} parent=23 // pred_check_branch
        %130 = sbr.rel (%p128) target = $region28
      $region27: #{decoder_forward.3} parent=23 // pred_region
        %p131 = scmp.lt.s32.totalorder %s9, 3
        %s132 = scalar_select %p131, %s9, 3
        %s133 = smul.addr %s132, 8
        %s134 = smul.addr %s133, 4
        %s135 = scalar_lea.vmem %s1, %s134
      $region28: #{decoder_forward.3} parent=23 // pred_fallthru
        _
    $region24: #{decoder_forward.3} parent=5 // pred_fallthru
      _
    %p136 = scmp.le.s32.totalorder 1, %s9
    %p137 = scmp.lt.s32.totalorder %s9, 5
    %p138 = pnand %p136, %p137
    %p139 = pneg %p138
    // Predicated region
    $region29: #{decoder_forward.3} parent=5 // pred_check
      _
    $region30: #{decoder_forward.3} parent=5 // pred_check_branch
      %141 = sbr.rel (%p138) target = $region32
    $region31: #{decoder_forward.3} parent=5 // pred_region
      %s142 = ssub.s32 %s9, 1
      %p143 = pneg %p30
      %p144 = pneg %p27
      %p145 = scmp.lt.s32.totalorder %s14, 3
      %s146 = scalar_select %p145, %s14, 3
      %s147 = smul.addr %s146, 8
      %s148 = smul.addr %s147, 4
      %s149 = scalar_lea.vmem %s1, %s148
      %p150 = pneg %p56
      %p151 = pneg %p53
      %p152 = pneg %p77
      %p153 = pneg %p74
      %p154 = pneg %p103
      %p155 = pneg %p100
      %p156 = scmp.lt.s32.totalorder %s14, 3
      %s157 = scalar_select %p156, %s14, 3
      %s158 = smul.addr %s157, 8
      %s159 = scalar_lea.vmem %s3, %s158
      %p160 = scmp.lt.s32.totalorder %s14, 3
      %s161 = scalar_select %p160, %s14, 3
      %s162 = smul.addr %s161, 8
      %s163 = smul.addr %s162, 4
      %s164 = scalar_lea.vmem %s1, %s163
      %p165 = scmp.lt.s32.totalorder %s14, 3
      %s166 = scalar_select %p165, %s14, 3
      %s167 = smul.addr %s166, 8
      %s168 = scalar_lea.vmem %s3, %s167
      %s170 = smul.u32 %s14, 128
      %v171 = vld [vmem:[%s0] sm:$0xf]
      %v172 = vld [vmem:[%s164] sm:$0xf]
      %v173 = vld [vmem:[%s164 + $0x4] sm:$0xf]
      %v174 = vld [vmem:[%s164 + $0x8] sm:$0xf]
      %v175 = vld [vmem:[%s164 + $0xc] sm:$0xf]
      %v176 = vld [vmem:[%s164 + $0x10] sm:$0xf]
      %v177 = vld [vmem:[%s164 + $0x14] sm:$0xf]
      %v178 = vld [vmem:[%s164 + $0x18] sm:$0xf]
      %v179 = vld [vmem:[%s164 + $0x1c] sm:$0xf]
      %s180 = sshra.s32 %s170, 7
      %s181 = sand.u32 %s170, 127
      %s182 = scalar_lea.vmem %s2, %s180
      %v183 = vld [vmem:[%s182] sm:$0x1]
      %v185 = vlaneseq
      %v186 = vshrl.u32 %v185, 7
      %v187 = vsub.s32 0, %v186
      %v188 = vrot.slane %v183, %v187
      %v198 = vunpack.c.l.b16 %v172
      %v199 = vunpack.c.l.b16 %v173
      %v200 = vunpack.c.l.b16 %v174
      %v201 = vunpack.c.l.b16 %v175
      %v202 = vunpack.c.l.b16 %v176
      %v203 = vunpack.c.l.b16 %v177
      %v204 = vunpack.c.l.b16 %v178
      %v205 = vunpack.c.l.b16 %v179
      %v206 = vpack.c.b16 %v199, %v198
      %v207 = vpack.c.b16 %v201, %v200
      %v208 = vpack.c.b16 %v203, %v202
      %v209 = vpack.c.b16 %v205, %v204
      %vm214 = vcmask 523264
      %v216 = vsel %vm214, %v171, 0
      %218 = vmatprep.subr.bf16.mxu0 0
      %219 = vmatpush1.bf16.msra.mxu0 %v206
      %220 = vmatprep.subr.bf16.mxu0 0
      %221 = vmatpush1.bf16.msra.mxu0 %v207
      %222 = vmatprep.subr.bf16.mxu0 0
      %223 = vmatpush1.bf16.msra.mxu0 %v208
      %224 = vmatprep.subr.bf16.mxu0 0
      %225 = vmatpush1.bf16.msra.mxu0 %v209
      %226 = vmatprep.subr.bf16.mxu0 0
      %227 = vmatpush1.bf16.msra.mxu0 0
      %228 = vmatprep.subr.bf16.mxu0 0
      %229 = vmatpush1.bf16.msra.mxu0 0
      %230 = vmatprep.subr.bf16.mxu0 0
      %231 = vmatpush1.bf16.msra.mxu0 0
      %232 = vmatprep.subr.bf16.mxu0 0
      %233 = vmatpush1.bf16.msra.mxu0 0
      %234 = vmatprep.subr.bf16.mxu0 0
      %235 = vmatpush1.bf16.msra.mxu0 0
      %236 = vmatprep.subr.bf16.mxu0 0
      %237 = vmatpush1.bf16.msra.mxu0 0
      %238 = vmatprep.subr.bf16.mxu0 0
      %239 = vmatpush1.bf16.msra.mxu0 0
      %240 = vmatprep.subr.bf16.mxu0 0
      %241 = vmatpush1.bf16.msra.mxu0 0
      %242 = vmatprep.subr.bf16.mxu0 0
      %243 = vmatpush1.bf16.msra.mxu0 0
      %244 = vmatprep.subr.bf16.mxu0 0
      %245 = vmatpush1.bf16.msra.mxu0 0
      %246 = vmatprep.subr.bf16.mxu0 0
      %247 = vmatpush1.bf16.msra.mxu0 0
      %248 = vmatprep.subr.bf16.mxu0 0
      %249 = vmatpush1.bf16.msra.mxu0 0
      %250 = vmatprep.mubr.bf16.mxu0 0
      %251 = vmatmul.mubr.bf16.gmra.mrb[0].mxu0 %v216
      %v252 = vpop.f32.mrb[0].mxu0
      %v253 = vadd.f32 %v188, %v252
      %v254 = vpop.f32.mrb[0].mxu0
      %v255 = vpop.f32.mrb[0].mxu0
      %v256 = vpop.f32.mrb[0].mxu0
      %257 = vdwg.mxu0
      %258 = vst [vmem:[%s168] sm:$0xff] %v253
      %p259 = scmp.lt.s32.totalorder %s14, 3
      %s260 = scalar_select %p259, %s14, 3
      %s261 = smul.addr %s260, 8
      %s262 = scalar_lea.vmem %s3, %s261
      // Predicated region
      $region33: #{decoder_forward.3} parent=31 // pred_check
        %p263 = pneg %p100
      $region34: #{decoder_forward.3} parent=31 // pred_check_branch
        %265 = sbr.rel (%p263) target = $region36
      $region35: #{decoder_forward.3} parent=31 // pred_region
        _
      $region36: #{decoder_forward.3} parent=31 // pred_fallthru
        _
    $region32: #{decoder_forward.3} parent=5 // pred_fallthru
      _
    %p266 = scmp.le.s32.totalorder 2, %s9
    // Predicated region
    $region37: #{decoder_forward.3} parent=5 // pred_check
      %p267 = pneg %p266
    $region38: #{decoder_forward.3} parent=5 // pred_check_branch
      %269 = sbr.rel (%p267) target = $region40
    $region39: #{decoder_forward.3} parent=5 // pred_region
      %s270 = ssub.s32 %s9, 2
      // Predicated region
      $region41: #{decoder_forward.3} parent=39 // pred_check
        %p271 = pneg %p106
      $region42: #{decoder_forward.3} parent=39 // pred_check_branch
        %273 = sbr.rel (%p271) target = $region44
      $region43: #{decoder_forward.3} parent=39 // pred_region
        %p274 = scmp.lt.s32.totalorder %s15, 3
        %s275 = scalar_select %p274, %s15, 3
        %s276 = smul.addr %s275, 8
        %s277 = scalar_lea.vmem %s3, %s276
      $region44: #{decoder_forward.3} parent=39 // pred_fallthru
        _
    $region40: #{decoder_forward.3} parent=5 // pred_fallthru
      _
  $region6: #{decoder_forward.3} parent=0 // loop_footer
    %s13 = sadd.s32 1, %s9
  $region7: #{decoder_forward.3} parent=0 // loop_footer_branch
    %8 = sbr.rel target = $region3
  $region8: #{decoder_forward.3} parent=0 // loop_exit
    _

</llo_original>
